<compile_context>
chip_gen: v6e
topology: v6e:2x2x1
jax: 0.10.0
libtpu: 0.0.40
codegen_flags: <defaults>
</compile_context>

<pallas_src>
import jax
import jax.numpy as jnp
from jax.experimental import pallas as pl
from jax.experimental.pallas import tpu as pltpu

_EPS = 1e-5
_LANES = 128
_SUBLANES = 8
_MAX_TILE_ROWS = 1024          # 1024 * 128 * 4 B = 0.5 MiB f32 per input block


def _round_up(x, m):
    return ((x + m - 1) // m) * m


def _stats_kernel(sp_ref, h_ref, w_ref, stats_ref):
    """Phase 1: accumulate per-lane partial sums of d and d*d.

    sp_ref (SMEM f32[7]): [gamma, beta, w0, w1, b, shift_h, shift_w]
    h_ref / w_ref:        (TR, 128) tiles of the height / weight slabs
    stats_ref:            (8, 128) f32 resident accumulator, rows:
                          [sum d_h, sum d_w, sum d_h^2, sum d_w^2, 0, 0, 0, 0]
    """
    @pl.when(pl.program_id(0) == 0)
    def _():
        stats_ref[...] = jnp.zeros_like(stats_ref)

    shift_h = sp_ref[5]
    shift_w = sp_ref[6]
    # Upcast fused into the shift-subtract (no separate f32 copy of the tile).
    d_h = h_ref[...].astype(jnp.float32) - shift_h
    d_w = w_ref[...].astype(jnp.float32) - shift_w
    partial = jnp.concatenate(
        [jnp.sum(d_h, axis=0, keepdims=True),
         jnp.sum(d_w, axis=0, keepdims=True),
         jnp.sum(d_h * d_h, axis=0, keepdims=True),
         jnp.sum(d_w * d_w, axis=0, keepdims=True),
         jnp.zeros((4, _LANES), jnp.float32)],
        axis=0)
    stats_ref[...] += partial


def _make_output_kernel(n_valid):
    inv_n = 1.0 / float(n_valid)

    def kernel(sp_ref, stats_ref, h_ref, w_ref, o_ref):
        gamma = sp_ref[0]
        beta = sp_ref[1]
        w0 = sp_ref[2]
        w1 = sp_ref[3]
        b = sp_ref[4]
        shift_h = sp_ref[5]
        shift_w = sp_ref[6]

        # Fold stats + BN affine + Linear(2->1) into one scale per feature and a
        # shared offset.  Tiny; recomputed per tile and hidden under the DMA.
        sums = jnp.sum(stats_ref[...], axis=1, keepdims=True)     # (8, 1)
        m1 = sums[0:2] * inv_n                                     # E[d]   (2, 1)
        m2 = sums[2:4] * inv_n                                     # E[d^2] (2, 1)
        var = m2 - m1 * m1                                         # biased var
        a = jax.lax.rsqrt(var + _EPS) * gamma                      # (2, 1)
        a0 = a[0:1] * w0                                           # (1, 1)
        a1 = a[1:2] * w1                                           # (1, 1)
        c = b + beta * (w0 + w1) - m1[0:1] * a0 - m1[1:2] * a1     # (1, 1)

        d_h = h_ref[...].astype(jnp.float32) - shift_h
        d_w = w_ref[...].astype(jnp.float32) - shift_w
        z = d_h * a0 + d_w * a1 + c
        o_ref[...] = jax.nn.sigmoid(z).astype(o_ref.dtype)

    return kernel


def _vmem_capacity_bytes():
    try:
        cap = getattr(pltpu.get_tpu_info(), "vmem_capacity_bytes", None)
        if cap:
            return int(cap)
    except Exception:
        pass
    return 64 << 20       # conservative fallback = v7x physical VMEM per core


def _to_storage(v):
    # Keep bf16/f32 as-is in HBM; upcast happens inside the kernels.
    if v.dtype in (jnp.float32, jnp.bfloat16):
        return v
    return v.astype(jnp.float32)


def model_forward(height, weigh, params, *, max_tile_rows=_MAX_TILE_ROWS):
    """height, weigh: float[N]; params: f32[5] = [gamma, beta, w0, w1, b].

    Returns float[N, 1] matching PyTorch Model.forward (training-mode BN stats).
    Output dtype is bf16 iff both inputs are bf16, else f32.
    """
    n = height.shape[0]
    assert weigh.shape == (n,)

    h = _to_storage(height)
    w = _to_storage(weigh)
    out_dtype = (jnp.bfloat16
                 if (h.dtype == jnp.bfloat16 and w.dtype == jnp.bfloat16)
                 else jnp.float32)

    r0 = pl.cdiv(n, _LANES)                                # rows holding real data
    tr = _round_up(min(max_tile_rows, _round_up(r0, _SUBLANES)), _SUBLANES)
    r = _round_up(r0, tr)                                  # padded rows
    n_pad = r * _LANES
    num_tiles = r // tr

    # Shift for cancellation-safe single-pass statistics; also the pad value, so
    # the padded tail contributes exactly 0 to every shifted sum (no masking).
    shift_h = h[0].astype(jnp.float32)
    shift_w = w[0].astype(jnp.float32)

    def slab(v):
        if n_pad != n:
            v = jnp.concatenate([v, jnp.full((n_pad - n,), v[0], dtype=v.dtype)])
        return v.reshape(r, _LANES)

    h2 = slab(h)
    w2 = slab(w)

    # SMEM scalars: [gamma, beta, w0, w1, b, shift_h, shift_w]
    sparams = jnp.concatenate(
        [params.astype(jnp.float32).reshape(-1), jnp.stack([shift_h, shift_w])])

    # Generation-aware VMEM budget (v7x: 64 MiB physical, v5e/v6e: 128 MiB).
    blk = tr * _LANES
    in_bytes = blk * (jnp.dtype(h2.dtype).itemsize + jnp.dtype(w2.dtype).itemsize)
    out_bytes = blk * jnp.dtype(out_dtype).itemsize
    stats_bytes = _SUBLANES * _LANES * 4
    temps_bytes = 6 * blk * 4                              # d_h, d_w, z f32 temps
    vmem_needed = 2 * (in_bytes + out_bytes) + 2 * stats_bytes + temps_bytes + (2 << 20)
    vmem_limit = min(max(vmem_needed, 32 << 20), int(0.75 * _vmem_capacity_bytes()))
    vmem_limit = int(max(vmem_limit, vmem_needed))

    tile_spec = pl.BlockSpec((tr, _LANES), lambda i: (i, 0))
    stats_spec = pl.BlockSpec((_SUBLANES, _LANES), lambda i: (0, 0))
    smem_spec = pl.BlockSpec(memory_space=pltpu.MemorySpace.SMEM)

    # Phase 1: stats reduction over tiles (sequential accumulator axis).
    stats = pl.pallas_call(
        _stats_kernel,
        out_shape=jax.ShapeDtypeStruct((_SUBLANES, _LANES), jnp.float32),
        grid=(num_tiles,),
        in_specs=[smem_spec, tile_spec, tile_spec],
        out_specs=stats_spec,
        compiler_params=pltpu.CompilerParams(
            dimension_semantics=("arbitrary",), vmem_limit_bytes=vmem_limit),
    )(sparams, h2, w2)

    # Phase 2: fused normalize + Linear + sigmoid, elementwise per tile
    # ("parallel" -> sharded across both TensorCores on v7x).
    out = pl.pallas_call(
        _make_output_kernel(n),
        out_shape=jax.ShapeDtypeStruct((r, _LANES), out_dtype),
        grid=(num_tiles,),
        in_specs=[smem_spec, stats_spec, tile_spec, tile_spec],
        out_specs=tile_spec,
        compiler_params=pltpu.CompilerParams(
            dimension_semantics=("parallel",), vmem_limit_bytes=vmem_limit),
    )(sparams, stats, h2, w2)

    return out.reshape(n_pad)[:n].reshape(n, 1)


def _reference(height, weigh, params):
    gamma, beta, w0, w1, b = [params[i] for i in range(5)]

    def bn(x):
        m = jnp.mean(x)
        v = jnp.mean((x - m) ** 2)
        return (x - m) / jnp.sqrt(v + _EPS) * gamma + beta

    hn = bn(height.astype(jnp.float32))
    wn = bn(weigh.astype(jnp.float32))
    z = hn * w0 + wn * w1 + b
    return jax.nn.sigmoid(z).reshape(-1, 1)


if __name__ == "__main__":
    key = jax.random.PRNGKey(0)
    k1, k2, k3, k4 = jax.random.split(key, 4)

    # Parameters: BatchNorm1d(1) defaults gamma=1, beta=0; Linear(2,1) random.
    lin_w = jax.random.normal(k3, (1, 2), dtype=jnp.float32) * 0.5
    lin_b = jax.random.normal(k4, (1,), dtype=jnp.float32) * 0.1
    params = jnp.array(
        [1.0, 0.0, lin_w[0, 0], lin_w[0, 1], lin_b[0]], dtype=jnp.float32)

    # Small single-tile case (batch = 8).
    N = 8
    height = jax.random.normal(k1, (N,), dtype=jnp.float32) * 10.0 + 170.0
    weigh = jax.random.normal(k2, (N,), dtype=jnp.float32) * 5.0 + 70.0
    out = jax.block_until_ready(model_forward(height, weigh, params))
    ref = _reference(height, weigh, params)
    assert out.shape == (N, 1), out.shape
    assert jnp.allclose(out, ref, atol=2e-5, rtol=1e-4), (out, ref)

    # Multi-tile case (still small data; tiny tile to exercise the 2-phase grid).
    N2 = 2000
    height2 = jax.random.normal(k1, (N2,), dtype=jnp.float32) * 10.0 + 170.0
    weigh2 = jax.random.normal(k2, (N2,), dtype=jnp.float32) * 5.0 + 70.0
    out2 = jax.block_until_ready(
        model_forward(height2, weigh2, params, max_tile_rows=8))
    ref2 = _reference(height2, weigh2, params)
    assert out2.shape == (N2, 1), out2.shape
    assert jnp.allclose(out2, ref2, atol=5e-5, rtol=1e-4), float(
        jnp.max(jnp.abs(out2 - ref2)))

    print("KERNEL_OK")
</pallas_src>

<mosaic_0001>
module attributes {stable_mosaic.version = 11 : i64} {
  func.func @_stats_kernel(%arg0: i32, %arg1: memref<7xf32, #tpu.memory_space<smem>>, %arg2: memref<8x128xf32, #tpu.memory_space<vmem>>, %arg3: memref<8x128xf32, #tpu.memory_space<vmem>>, %arg4: memref<8x128xf32, #tpu.memory_space<vmem>>) attributes {dimension_semantics = [#tpu.dimension_semantics<arbitrary>], iteration_bounds = array<i64: 1>, scalar_prefetch = 0 : i64, scratch_operands = 0 : i64, tpu.core_type = #tpu.core_type<tc>, window_params = [{transform_indices = @transform_0, window_bounds = array<i64: 7>}, {transform_indices = @transform_1, window_bounds = array<i64: 8, 128>}, {transform_indices = @transform_2, window_bounds = array<i64: 8, 128>}, {pipeline_mode = #tpu.pipeline_mode<synchronous>, transform_indices = @transform_3, window_bounds = array<i64: 8, 128>}]} {
    %c0_i32 = arith.constant 0 : i32
    %0 = arith.cmpi eq, %arg0, %c0_i32 : i32
    %1 = arith.extui %0 : i1 to i32
    %c0_i32_0 = arith.constant 0 : i32
    %2 = arith.cmpi ne, %1, %c0_i32_0 : i32
    scf.if %2 {
      %cst_12 = arith.constant 0.000000e+00 : f32
      %26 = vector.broadcast %cst_12 : f32 to vector<8x128xf32>
      %c0_13 = arith.constant 0 : index
      %c0_14 = arith.constant 0 : index
      %27 = vector.load %arg4[%c0_13, %c0_14] : memref<8x128xf32, #tpu.memory_space<vmem>>, vector<8x128xf32>
      tpu.vector_store %arg4[%c0_13, %c0_14], %26 {strides = array<i32>} : memref<8x128xf32, #tpu.memory_space<vmem>>, vector<8x128xf32>,
    } else {
    }
    %c5 = arith.constant 5 : index
    %3 = memref.load %arg1[%c5] : memref<7xf32, #tpu.memory_space<smem>>
    %c6 = arith.constant 6 : index
    %4 = memref.load %arg1[%c6] : memref<7xf32, #tpu.memory_space<smem>>
    %c0 = arith.constant 0 : index
    %c0_1 = arith.constant 0 : index
    %5 = vector.load %arg2[%c0, %c0_1] : memref<8x128xf32, #tpu.memory_space<vmem>>, vector<8x128xf32>
    %6 = vector.broadcast %3 : f32 to vector<8x128xf32>
    %7 = arith.subf %5, %6 : vector<8x128xf32>
    %c0_2 = arith.constant 0 : index
    %c0_3 = arith.constant 0 : index
    %8 = vector.load %arg3[%c0_2, %c0_3] : memref<8x128xf32, #tpu.memory_space<vmem>>, vector<8x128xf32>
    %9 = vector.broadcast %4 : f32 to vector<8x128xf32>
    %10 = arith.subf %8, %9 : vector<8x128xf32>
    %cst = arith.constant dense<0.000000e+00> : vector<128xf32>
    %11 = vector.multi_reduction <add>, %7, %cst [0] : vector<8x128xf32> to vector<128xf32>
    %12 = vector.shape_cast %11 : vector<128xf32> to vector<1x128xf32>
    %cst_4 = arith.constant dense<0.000000e+00> : vector<128xf32>
    %13 = vector.multi_reduction <add>, %10, %cst_4 [0] : vector<8x128xf32> to vector<128xf32>
    %14 = vector.shape_cast %13 : vector<128xf32> to vector<1x128xf32>
    %15 = arith.mulf %7, %7 : vector<8x128xf32>
    %cst_5 = arith.constant dense<0.000000e+00> : vector<128xf32>
    %16 = vector.multi_reduction <add>, %15, %cst_5 [0] : vector<8x128xf32> to vector<128xf32>
    %17 = vector.shape_cast %16 : vector<128xf32> to vector<1x128xf32>
    %18 = arith.mulf %10, %10 : vector<8x128xf32>
    %cst_6 = arith.constant dense<0.000000e+00> : vector<128xf32>
    %19 = vector.multi_reduction <add>, %18, %cst_6 [0] : vector<8x128xf32> to vector<128xf32>
    %20 = vector.shape_cast %19 : vector<128xf32> to vector<1x128xf32>
    %cst_7 = arith.constant 0.000000e+00 : f32
    %21 = vector.broadcast %cst_7 : f32 to vector<4x128xf32>
    %22 = tpu.concatenate %12, %14, %17, %20, %21 in 0 : vector<1x128xf32>, vector<1x128xf32>, vector<1x128xf32>, vector<1x128xf32>, vector<4x128xf32> -> vector<8x128xf32>
    %c0_8 = arith.constant 0 : index
    %c0_9 = arith.constant 0 : index
    %23 = vector.load %arg4[%c0_8, %c0_9] : memref<8x128xf32, #tpu.memory_space<vmem>>, vector<8x128xf32>
    %24 = arith.addf %23, %22 : vector<8x128xf32>
    %c0_10 = arith.constant 0 : index
    %c0_11 = arith.constant 0 : index
    %25 = vector.load %arg4[%c0_10, %c0_11] : memref<8x128xf32, #tpu.memory_space<vmem>>, vector<8x128xf32>
    tpu.vector_store %arg4[%c0_10, %c0_11], %24 {strides = array<i32>} : memref<8x128xf32, #tpu.memory_space<vmem>>, vector<8x128xf32>,
    return
  }
  func.func @transform_0(%arg0: i32) -> i32 {
    %c0_i32 = arith.constant 0 : i32
    %c0_i32_0 = arith.constant 0 : i32
    return %c0_i32 : i32
  }
  func.func @transform_1(%arg0: i32) -> (i32, i32) {
    %c0_i32 = arith.constant 0 : i32
    %c0_i32_0 = arith.constant 0 : i32
    return %arg0, %c0_i32 : i32, i32
  }
  func.func @transform_2(%arg0: i32) -> (i32, i32) {
    %c0_i32 = arith.constant 0 : i32
    %c0_i32_0 = arith.constant 0 : i32
    return %arg0, %c0_i32 : i32, i32
  }
  func.func @transform_3(%arg0: i32) -> (i32, i32) {
    %c0_i32 = arith.constant 0 : i32
    %c0_i32_0 = arith.constant 0 : i32
    %c0_i32_1 = arith.constant 0 : i32
    return %c0_i32, %c0_i32_0 : i32, i32
  }
}

</mosaic_0001>

<llo_original>
// kernel: tpu_custom_call.1
$region0: #{tpu_custom_call.1}
  #allocation0 [shape = 'u32[]', space=smem, size = 0x4, offset = 0x4, fixed_abs, tag = 'smem constant byte address 0x4 - core index']
  #allocation1 [shape = 'u32[144,128]{1,0:T(1,128)}', space=vmem, size = 0x12000, scoped, tag = 'internal scratch']
  %s0 = inlined_call_operand.hbm [shape: f32[7], index: 0, kind: input, shape index: {}]
  %s1 = inlined_call_operand.hbm [shape: f32[8,128], index: 1, kind: input, shape index: {}]
  %s2 = inlined_call_operand.hbm [shape: f32[8,128], index: 2, kind: input, shape index: {}]
  %s3 = inlined_call_operand.hbm [shape: f32[8,128], index: 3, kind: output, shape index: {}]
  %s4 = sld [smem:[#allocation0]]
  $region38: #{tpu_custom_call.1} parent=0
    _
  %s6 = ssub.s32 1, %s4
  %s7 = scalar_select 0, %s6, %s4
  $region1: #{tpu_custom_call.1} parent=0
    #allocation2 [shape = 'u8[512]{0}', space=smem, size = 0x200, scoped, tag = 'input window, operand 0, single buffered']
    #allocation3 [shape = 's32[1]{0}', space=sflag, size = 0x4, scoped, tag = 'scoped memory for tpu_custom_call.1']
    #allocation4 [shape = 's32[1]{0}', space=sflag, size = 0x4, scoped, tag = 'scoped memory for tpu_custom_call.1']
    #allocation5 [shape = 's32[1]{0}', space=sflag, size = 0x4, scoped, tag = 'scoped memory for tpu_custom_call.1']
    #allocation6 [shape = 'u8[4096]{0}', space=vmem, size = 0x1000, scoped, tag = 'input window, operand 1, single buffered']
    #allocation7 [shape = 'u8[4096]{0}', space=vmem, size = 0x1000, scoped, tag = 'input window, operand 2, single buffered']
    #allocation8 [shape = 's32[1]{0}', space=sflag, size = 0x4, scoped, tag = 'scoped memory for tpu_custom_call.1']
    #allocation9 [shape = 'u8[4096]{0}', space=vmem, size = 0x1000, scoped, tag = 'output window, operand 0, single buffered']
    %8 = vsyncpa [#allocation5], 0
    %9 = vsyncpa [#allocation3], 0
    %10 = vsyncpa [#allocation8], 0
    %11 = vsyncpa [#allocation4], 0
    // Predicated region
    $region2: #{tpu_custom_call.1} parent=1 // pred_check
      _
    $region3: #{tpu_custom_call.1} parent=1 // pred_check_branch
      %13 = sbr.rel (0) target = $region5
    $region4: #{tpu_custom_call.1} parent=1 // pred_region
      %s15 = ssub.s32 16, 16
      %16 = vsyncadd [#allocation5], %s15
      %19 = dma.hbm_to_smem %s0, 16, [#allocation2], [#allocation5]
    $region5: #{tpu_custom_call.1} parent=1 // pred_fallthru
      _
    // Predicated region
    $region6: #{tpu_custom_call.1} parent=1 // pred_check
      _
    $region7: #{tpu_custom_call.1} parent=1 // pred_check_branch
      %21 = sbr.rel (0) target = $region9
    $region8: #{tpu_custom_call.1} parent=1 // pred_region
      %s23 = ssub.s32 128, 128
      %24 = vsyncadd [#allocation3], %s23
      %s26 = sshll.u32 [#allocation6], 4
      %s27 = int_to_ptr.vmem [resolvable:$true] %s26
      %29 = dma.hbm_to_vmem [thread:$0]  %s1, 128, %s27, [#allocation3]
    $region9: #{tpu_custom_call.1} parent=1 // pred_fallthru
      _
    // Predicated region
    $region10: #{tpu_custom_call.1} parent=1 // pred_check
      _
    $region11: #{tpu_custom_call.1} parent=1 // pred_check_branch
      %31 = sbr.rel (0) target = $region13
    $region12: #{tpu_custom_call.1} parent=1 // pred_region
      %s33 = ssub.s32 128, 128
      %34 = vsyncadd [#allocation8], %s33
      %s36 = sshll.u32 [#allocation7], 4
      %s37 = int_to_ptr.vmem [resolvable:$true] %s36
      %39 = dma.hbm_to_vmem [thread:$0]  %s2, 128, %s37, [#allocation8]
    $region13: #{tpu_custom_call.1} parent=1 // pred_fallthru
      _
    // Predicated region
    $region14: #{tpu_custom_call.1} parent=1 // pred_check
      _
    $region15: #{tpu_custom_call.1} parent=1 // pred_check_branch
      %41 = sbr.rel (0) target = $region17
    $region16: #{tpu_custom_call.1} parent=1 // pred_region
      %42 = dma.done [#allocation5], 16
    $region17: #{tpu_custom_call.1} parent=1 // pred_fallthru
      _
    // Predicated region
    $region18: #{tpu_custom_call.1} parent=1 // pred_check
      _
    $region19: #{tpu_custom_call.1} parent=1 // pred_check_branch
      %44 = sbr.rel (0) target = $region21
    $region20: #{tpu_custom_call.1} parent=1 // pred_region
      %45 = dma.done [#allocation3], 128
    $region21: #{tpu_custom_call.1} parent=1 // pred_fallthru
      _
    // Predicated region
    $region22: #{tpu_custom_call.1} parent=1 // pred_check
      _
    $region23: #{tpu_custom_call.1} parent=1 // pred_check_branch
      %47 = sbr.rel (0) target = $region25
    $region24: #{tpu_custom_call.1} parent=1 // pred_region
      %48 = dma.done [#allocation8], 128
    $region25: #{tpu_custom_call.1} parent=1 // pred_fallthru
      _
    %49 = sfence
    %p50 = scmp.eq.s32.totalorder 0, 0
    // Predicated region
    $region26: #{tpu_custom_call.1} parent=1 // pred_check
      %p51 = pneg %p50
    $region27: #{tpu_custom_call.1} parent=1 // pred_check_branch
      %53 = sbr.rel (%p51) target = $region29
    $region28: #{tpu_custom_call.1} parent=1 // pred_region
      %54 = vst [vmem:[#allocation9] sm:$0xff] 0.0
    $region29: #{tpu_custom_call.1} parent=1 // pred_fallthru
      _
    %s55 = sld [smem:[#allocation2 + $0x5]]
    %s56 = sld [smem:[#allocation2 + $0x6]]
    %v57 = vld [vmem:[#allocation6] sm:$0xff]
    %v58 = vstv %s55
    %v59 = vsub.f32 %v57, %v58
    %v60 = vld [vmem:[#allocation7] sm:$0xff]
    %v61 = vstv %s56
    %v62 = vsub.f32 %v60, %v61
    %v63 = vrot.slane %v59, 4
    %v64 = vadd.f32 %v59, %v63
    %v65 = vrot.slane %v64, 2
    %v66 = vadd.f32 %v64, %v65
    %v67 = vrot.slane %v66, 1
    %v68 = vadd.f32 %v66, %v67
    %v69 = vrot.slane %v62, 4
    %v70 = vadd.f32 %v62, %v69
    %v71 = vrot.slane %v70, 2
    %v72 = vadd.f32 %v70, %v71
    %v73 = vrot.slane %v72, 1
    %v74 = vadd.f32 %v72, %v73
    %v75 = vmul.f32 %v59, %v59
    %v76 = vrot.slane %v75, 4
    %v77 = vadd.f32 %v75, %v76
    %v78 = vrot.slane %v77, 2
    %v79 = vadd.f32 %v77, %v78
    %v80 = vrot.slane %v79, 1
    %v81 = vadd.f32 %v79, %v80
    %v82 = vmul.f32 %v62, %v62
    %v83 = vrot.slane %v82, 4
    %v84 = vadd.f32 %v82, %v83
    %v85 = vrot.slane %v84, 2
    %v86 = vadd.f32 %v84, %v85
    %v87 = vrot.slane %v86, 1
    %v88 = vadd.f32 %v86, %v87
    %vm89 = vcmask 1040384
    %v90 = vsel %vm89, %v68, %v74
    %vm91 = vcmask 1041408
    %v92 = vsel %vm91, %v90, %v81
    %vm93 = vcmask 1042432
    %v94 = vsel %vm93, %v92, %v88
    %vm95 = vcmask 1043456
    %v96 = vsel %vm95, %v94, 0.0
    %v97 = vld [vmem:[#allocation9] sm:$0xff]
    %v98 = vadd.f32 %v97, %v96
    %99 = vst [vmem:[#allocation9] sm:$0xff] %v98
    // Predicated region
    $region30: #{tpu_custom_call.1} parent=1 // pred_check
      _
    $region31: #{tpu_custom_call.1} parent=1 // pred_check_branch
      %101 = sbr.rel (0) target = $region33
    $region32: #{tpu_custom_call.1} parent=1 // pred_region
      %s103 = ssub.s32 128, 128
      %104 = vsyncadd [#allocation4], %s103
      %s106 = sshll.u32 [#allocation9], 4
      %s107 = int_to_ptr.vmem [resolvable:$true] %s106
      %109 = dma.vmem_to_hbm [thread:$0]  %s107, 128, %s3, [#allocation4]
    $region33: #{tpu_custom_call.1} parent=1 // pred_fallthru
      _
    // Predicated region
    $region34: #{tpu_custom_call.1} parent=1 // pred_check
      _
    $region35: #{tpu_custom_call.1} parent=1 // pred_check_branch
      %111 = sbr.rel (0) target = $region37
    $region36: #{tpu_custom_call.1} parent=1 // pred_region
      %112 = dma.done [#allocation4], 128
    $region37: #{tpu_custom_call.1} parent=1 // pred_fallthru
      _
    %113 = vsyncpa [#allocation3], 1
    %114 = vsyncpa [#allocation8], 1
    %115 = vsyncpa [#allocation4], 1
    %116 = vsyncpa [#allocation5], 1

</llo_original>
